<compile_context>
chip_gen: v7x
topology: tpu7x:2x2x1
jax: 0.10.0
libtpu: 0.0.40
codegen_flags: <defaults>
</compile_context>

<pallas_src>
import math

import jax
import jax.numpy as jnp
from jax import lax
from jax.experimental import pallas as pl
from jax.experimental.pallas import tpu as pltpu

IN_F = 256
HID_F = 128
OUT_F = 2
BN_EPS = 1e-5
INV_SQRT2 = 1.0 / math.sqrt(2.0)


def mlp_kernel(x_ref, w1_ref, b1_ref, w2d_ref, b2d_ref, out_ref):
    # fc1 with BatchNorm1d(eval) scale/shift + bias pre-folded into (w1', b1'):
    # (TB, 256) @ (256, 128) -> (TB, 128), f32 accumulation on the MXU.
    h = jnp.dot(x_ref[...], w1_ref[...], preferred_element_type=jnp.float32)
    h = h + b1_ref[...]                                   # (TB,128) + (1,128)

    # Exact (erf-based) GELU, matching torch.nn.GELU default.
    h = 0.5 * h * (1.0 + lax.erf(h * INV_SQRT2))

    # Dropout(p=0.5) in eval mode is the identity.
    # TODO(synk): training-mode dropout (PRNG mask + 1/(1-p) scaling) not implemented.

    # 2-class fc2 + softmax == sigmoid of the logit difference.  Contract the
    # hidden dim of h against the single diff row so the result comes out in
    # transposed (1, TB) layout -> the (2, TB) output block stays lane-dense.
    d = lax.dot_general(w2d_ref[...], h, (((1,), (1,)), ((), ())),
                        preferred_element_type=jnp.float32)       # (1, TB)
    d = d + b2d_ref[...]                                          # + (1, 1)

    # Numerically stable 2-class softmax (exact, no overflow for any d).
    e = jnp.exp(-jnp.abs(d))              # in (0, 1]
    p_hi = 1.0 / (1.0 + e)                # prob of the larger logit
    p_lo = e * p_hi                       # prob of the smaller logit
    out_ref[0:1, :] = jnp.where(d >= 0, p_hi, p_lo).astype(out_ref.dtype)
    out_ref[1:2, :] = jnp.where(d >= 0, p_lo, p_hi).astype(out_ref.dtype)


def _round_up(n, m):
    return ((n + m - 1) // m) * m


def _choose_tiling(B, block_b, min_tiles=4):
    """Row tile: multiple of 128 (lane-dense transposed output), >= min_tiles
    grid steps for big batches (v7x megacore + pipelining), minimal padding."""
    b128 = _round_up(B, 128)
    tb = min(_round_up(block_b, 128), b128)
    if pl.cdiv(b128, tb) < min_tiles:
        tb = max(128, _round_up(pl.cdiv(b128, min_tiles), 128))
    b_pad = _round_up(B, tb)
    return tb, b_pad


def mlp_forward(x, params, *, block_b=4096, use_bf16=True):
    """x: (B, 256) float32. Returns (B, 2) float32 softmax probabilities."""
    B = x.shape[0]
    w1, b1, gamma, beta, run_mean, run_var, w2, b2 = params

    # ---- one-time wrapper-side folding (cheap glue, not in the kernel) ----
    # BatchNorm1d (eval) folded into fc1:  BN(x@w1 + b1) = x@(w1*s) + (b1*s + t)
    inv_std = 1.0 / jnp.sqrt(run_var + BN_EPS)
    scale = gamma * inv_std                               # (HID_F,)
    shift = beta - gamma * run_mean * inv_std             # (HID_F,)
    w1_f = w1 * scale[None, :]                            # (IN_F, HID_F)
    b1_f = (b1 * scale + shift).reshape(1, HID_F)         # (1, HID_F)

    # 2-class softmax only needs the logit difference.
    w2d = (w2[:, 0] - w2[:, 1]).reshape(1, HID_F).astype(jnp.float32)
    b2d = (b2[0] - b2[1]).reshape(1, 1).astype(jnp.float32)

    if use_bf16:
        x_in = x.astype(jnp.bfloat16)
        w1_in = w1_f.astype(jnp.bfloat16)
    else:
        x_in, w1_in = x, w1_f

    # ---- batch tiling ----
    TB, B_pad = _choose_tiling(B, block_b)
    if B_pad != B:
        x_in = jnp.pad(x_in, ((0, B_pad - B), (0, 0)))
    grid = (B_pad // TB,)

    resident = lambda shape: pl.BlockSpec(shape, lambda i: (0, 0))

    out_t = pl.pallas_call(
        mlp_kernel,
        out_shape=jax.ShapeDtypeStruct((OUT_F, B_pad), jnp.float32),
        grid_spec=pltpu.PrefetchScalarGridSpec(
            num_scalar_prefetch=0,
            grid=grid,
            in_specs=[
                pl.BlockSpec((TB, IN_F), lambda i: (i, 0)),   # x: row-tiled
                resident((IN_F, HID_F)),                      # w1' (BN folded)
                resident((1, HID_F)),                         # b1' (folded)
                resident((1, HID_F)),                         # w2[:,0]-w2[:,1]
                resident((1, 1)),                             # b2[0]-b2[1]
            ],
            out_specs=pl.BlockSpec((OUT_F, TB), lambda i: (0, i)),
        ),
        compiler_params=pltpu.CompilerParams(
            dimension_semantics=("parallel",),
            vmem_limit_bytes=32 * 1024 * 1024),
    )(x_in, w1_in, b1_f, w2d, b2d)

    return out_t[:, :B].T


def init_params(key):
    ks = jax.random.split(key, 4)
    # Match nn.Linear default init: U(-1/sqrt(fan_in), 1/sqrt(fan_in)).
    bound1 = 1.0 / math.sqrt(IN_F)
    w1 = jax.random.uniform(ks[0], (IN_F, HID_F), jnp.float32, -bound1, bound1)
    b1 = jax.random.uniform(ks[1], (HID_F,), jnp.float32, -bound1, bound1)

    bound2 = 1.0 / math.sqrt(HID_F)
    w2 = jax.random.uniform(ks[2], (HID_F, OUT_F), jnp.float32, -bound2, bound2)
    b2 = jax.random.uniform(ks[3], (OUT_F,), jnp.float32, -bound2, bound2)

    # BatchNorm1d params / running stats (eval mode).
    gamma = jnp.ones((HID_F,), jnp.float32)
    beta = jnp.zeros((HID_F,), jnp.float32)
    run_mean = jnp.zeros((HID_F,), jnp.float32)
    run_var = jnp.ones((HID_F,), jnp.float32)
    return (w1, b1, gamma, beta, run_mean, run_var, w2, b2)


def _reference(x, params):
    w1, b1, gamma, beta, rm, rv, w2, b2 = params
    h = x @ w1 + b1
    h = gamma * (h - rm) / jnp.sqrt(rv + BN_EPS) + beta
    h = 0.5 * h * (1.0 + lax.erf(h / math.sqrt(2.0)))
    return jax.nn.softmax(h @ w2 + b2, axis=-1)


if __name__ == "__main__":
    key = jax.random.PRNGKey(0)
    pkey, xkey, x2key = jax.random.split(key, 3)
    params = init_params(pkey)

    # Small batch: exact f32 path matches torch eval-mode semantics tightly.
    B = 8
    x = jax.random.normal(xkey, (B, IN_F), jnp.float32)
    ref = _reference(x, params)

    out_f32 = jax.block_until_ready(mlp_forward(x, params, use_bf16=False))
    assert out_f32.shape == (B, OUT_F)
    assert jnp.allclose(out_f32, ref, atol=1e-5, rtol=1e-5)

    # Default path (bf16 fc1 inputs, f32 accumulation): looser tolerance.
    out_bf16 = jax.block_until_ready(mlp_forward(x, params))
    assert out_bf16.shape == (B, OUT_F)
    assert jnp.allclose(out_bf16, ref, atol=2e-2, rtol=2e-2)

    # Non-multiple batch: exercises tail padding + multi-tile parallel grid.
    B2 = 300
    x2 = jax.random.normal(x2key, (B2, IN_F), jnp.float32)
    ref2 = _reference(x2, params)
    out2 = jax.block_until_ready(
        mlp_forward(x2, params, block_b=128, use_bf16=False))
    assert out2.shape == (B2, OUT_F)
    assert jnp.allclose(out2, ref2, atol=1e-5, rtol=1e-5)

    print("KERNEL_OK")
</pallas_src>

<mosaic_0001>
module attributes {stable_mosaic.version = 11 : i64} {
  func.func @mlp_kernel(%arg0: i32, %arg1: memref<128x256xf32, #tpu.memory_space<vmem>>, %arg2: memref<256x128xf32, #tpu.memory_space<vmem>>, %arg3: memref<1x128xf32, #tpu.memory_space<vmem>>, %arg4: memref<1x128xf32, #tpu.memory_space<vmem>>, %arg5: memref<1x1xf32, #tpu.memory_space<vmem>>, %arg6: memref<2x128xf32, #tpu.memory_space<vmem>>) attributes {dimension_semantics = [#tpu.dimension_semantics<parallel>], iteration_bounds = array<i64: 1>, scalar_prefetch = 0 : i64, scratch_operands = 0 : i64, tpu.core_type = #tpu.core_type<tc>, window_params = [{transform_indices = @transform_0, window_bounds = array<i64: 128, 256>}, {pipeline_mode = #tpu.pipeline_mode<synchronous>, transform_indices = @transform_1, window_bounds = array<i64: 256, 128>}, {pipeline_mode = #tpu.pipeline_mode<synchronous>, transform_indices = @transform_2, window_bounds = array<i64: 1, 128>}, {pipeline_mode = #tpu.pipeline_mode<synchronous>, transform_indices = @transform_3, window_bounds = array<i64: 1, 128>}, {pipeline_mode = #tpu.pipeline_mode<synchronous>, transform_indices = @transform_4, window_bounds = array<i64: 1, 1>}, {transform_indices = @transform_5, window_bounds = array<i64: 2, 128>}]} {
    %c0 = arith.constant 0 : index
    %c0_0 = arith.constant 0 : index
    %0 = vector.load %arg1[%c0, %c0_0] : memref<128x256xf32, #tpu.memory_space<vmem>>, vector<128x256xf32>
    %c0_1 = arith.constant 0 : index
    %c0_2 = arith.constant 0 : index
    %1 = vector.load %arg2[%c0_1, %c0_2] : memref<256x128xf32, #tpu.memory_space<vmem>>, vector<256x128xf32>
    %cst = arith.constant dense<0.000000e+00> : vector<128x128xf32>
    %2 = tpu.matmul %0, %1, %cst {dimension_numbers = #tpu.dot_dimension_numbers<[1], [0], [0], [1], [0, 0, 1, 1], [], []>} : vector<128x256xf32>, vector<256x128xf32>, vector<128x128xf32> -> vector<128x128xf32>
    %c0_3 = arith.constant 0 : index
    %c0_4 = arith.constant 0 : index
    %3 = vector.load %arg3[%c0_3, %c0_4] : memref<1x128xf32, #tpu.memory_space<vmem>>, vector<1x128xf32>
    %4 = vector.broadcast %3 : vector<1x128xf32> to vector<128x128xf32>
    %5 = arith.addf %2, %4 : vector<128x128xf32>
    %cst_5 = arith.constant 5.000000e-01 : f32
    %6 = vector.broadcast %cst_5 : f32 to vector<128x128xf32>
    %7 = arith.mulf %6, %5 : vector<128x128xf32>
    %cst_6 = arith.constant 0.707106769 : f32
    %8 = vector.broadcast %cst_6 : f32 to vector<128x128xf32>
    %9 = arith.mulf %5, %8 : vector<128x128xf32>
    %10 = math.erf %9 : vector<128x128xf32>
    %cst_7 = arith.constant 1.000000e+00 : f32
    %11 = vector.broadcast %cst_7 : f32 to vector<128x128xf32>
    %12 = arith.addf %11, %10 : vector<128x128xf32>
    %13 = arith.mulf %7, %12 : vector<128x128xf32>
    %c0_8 = arith.constant 0 : index
    %c0_9 = arith.constant 0 : index
    %14 = vector.load %arg4[%c0_8, %c0_9] : memref<1x128xf32, #tpu.memory_space<vmem>>, vector<1x128xf32>
    %cst_10 = arith.constant dense<0.000000e+00> : vector<1x128xf32>
    %15 = tpu.matmul %14, %13, %cst_10 {dimension_numbers = #tpu.dot_dimension_numbers<[1], [1], [0], [0], [0, 0, 1, 0], [], []>} : vector<1x128xf32>, vector<128x128xf32>, vector<1x128xf32> -> vector<1x128xf32>
    %c0_11 = arith.constant 0 : index
    %c0_12 = arith.constant 0 : index
    %16 = vector.load %arg5[%c0_11, %c0_12] : memref<1x1xf32, #tpu.memory_space<vmem>>, vector<1x1xf32>
    %17 = vector.broadcast %16 : vector<1x1xf32> to vector<1x128xf32>
    %18 = arith.addf %15, %17 : vector<1x128xf32>
    %19 = math.absf %18 : vector<1x128xf32>
    %cst_13 = arith.constant 0.000000e+00 : f32
    %20 = vector.broadcast %cst_13 : f32 to vector<1x128xf32>
    %21 = arith.subf %20, %19 : vector<1x128xf32>
    %22 = math.exp %21 : vector<1x128xf32>
    %cst_14 = arith.constant 1.000000e+00 : f32
    %23 = vector.broadcast %cst_14 : f32 to vector<1x128xf32>
    %24 = arith.addf %23, %22 : vector<1x128xf32>
    %cst_15 = arith.constant 1.000000e+00 : f32
    %25 = vector.broadcast %cst_15 : f32 to vector<1x128xf32>
    %26 = arith.divf %25, %24 : vector<1x128xf32>
    %27 = arith.mulf %22, %26 : vector<1x128xf32>
    %cst_16 = arith.constant 0.000000e+00 : f32
    %28 = vector.broadcast %cst_16 : f32 to vector<1x128xf32>
    %29 = arith.cmpf oge, %18, %28 : vector<1x128xf32>
    %30 = arith.select %29, %26, %27 : vector<1x128xi1>, vector<1x128xf32>
    %c0_17 = arith.constant 0 : index
    %c0_18 = arith.constant 0 : index
    %31 = vector.load %arg6[%c0_17, %c0_18] : memref<2x128xf32, #tpu.memory_space<vmem>>, vector<1x128xf32>
    tpu.vector_store %arg6[%c0_17, %c0_18], %30 {strides = array<i32>} : memref<2x128xf32, #tpu.memory_space<vmem>>, vector<1x128xf32>,
    %cst_19 = arith.constant 0.000000e+00 : f32
    %32 = vector.broadcast %cst_19 : f32 to vector<1x128xf32>
    %33 = arith.cmpf oge, %18, %32 : vector<1x128xf32>
    %34 = arith.select %33, %27, %26 : vector<1x128xi1>, vector<1x128xf32>
    %c1 = arith.constant 1 : index
    %c0_20 = arith.constant 0 : index
    %35 = vector.load %arg6[%c1, %c0_20] : memref<2x128xf32, #tpu.memory_space<vmem>>, vector<1x128xf32>
    tpu.vector_store %arg6[%c1, %c0_20], %34 {strides = array<i32>} : memref<2x128xf32, #tpu.memory_space<vmem>>, vector<1x128xf32>,
    return
  }
  func.func @transform_0(%arg0: i32) -> (i32, i32) {
    %c0_i32 = arith.constant 0 : i32
    %c0_i32_0 = arith.constant 0 : i32
    return %arg0, %c0_i32 : i32, i32
  }
  func.func @transform_1(%arg0: i32) -> (i32, i32) {
    %c0_i32 = arith.constant 0 : i32
    %c0_i32_0 = arith.constant 0 : i32
    %c0_i32_1 = arith.constant 0 : i32
    return %c0_i32, %c0_i32_0 : i32, i32
  }
  func.func @transform_2(%arg0: i32) -> (i32, i32) {
    %c0_i32 = arith.constant 0 : i32
    %c0_i32_0 = arith.constant 0 : i32
    %c0_i32_1 = arith.constant 0 : i32
    return %c0_i32, %c0_i32_0 : i32, i32
  }
  func.func @transform_3(%arg0: i32) -> (i32, i32) {
    %c0_i32 = arith.constant 0 : i32
    %c0_i32_0 = arith.constant 0 : i32
    %c0_i32_1 = arith.constant 0 : i32
    return %c0_i32, %c0_i32_0 : i32, i32
  }
  func.func @transform_4(%arg0: i32) -> (i32, i32) {
    %c0_i32 = arith.constant 0 : i32
    %c0_i32_0 = arith.constant 0 : i32
    %c0_i32_1 = arith.constant 0 : i32
    return %c0_i32, %c0_i32_0 : i32, i32
  }
  func.func @transform_5(%arg0: i32) -> (i32, i32) {
    %c0_i32 = arith.constant 0 : i32
    %c0_i32_0 = arith.constant 0 : i32
    return %c0_i32, %arg0 : i32, i32
  }
}

</mosaic_0001>

<llo_original>
// kernel: tpu_custom_call.1
$region0: #{tpu_custom_call.1}
  #allocation0 [shape = 'u32[]', space=smem, size = 0x4, offset = 0x4, fixed_abs, tag = 'smem constant byte address 0x4 - core index']
  #allocation1 [shape = 'u32[144,128]{1,0:T(1,128)}', space=vmem, size = 0x12000, scoped, tag = 'internal scratch']
  #allocation2 [shape = 'f32[1,1]{1,0:T(1,128)S(1)}', space=vmem, size = 0x200, scoped, tag = 'scoped memory for tpu_custom_call.1']
  %s0 = inlined_call_operand.hbm [shape: f32[128,256], index: 0, kind: input, shape index: {}]
  %s1 = inlined_call_operand.hbm [shape: f32[256,128], index: 1, kind: input, shape index: {}]
  %s2 = inlined_call_operand.vmem [shape: f32[1,128], index: 2, kind: input, shape index: {}]
  %s3 = inlined_call_operand.vmem [shape: f32[1,128], index: 3, kind: input, shape index: {}]
  %s4 = inlined_call_operand.<no memory space> [shape: f32[1,1], index: 4, kind: input, shape index: {}]
  %s5 = inlined_call_operand.hbm [shape: f32[2,128], index: 5, kind: output, shape index: {}]
  %s6 = sld [smem:[#allocation0]]
  $region38: #{tpu_custom_call.1} parent=0
    _
  %s8 = ssub.s32 1, %s6
  %s9 = scalar_select 0, %s8, %s6
  %v10 = vstv %s4
  %11 = vst [vmem:[#allocation2] sm:$0x1] %v10
  $region1: #{tpu_custom_call.1} parent=0
    #allocation3 [shape = 'u8[131072]{0}', space=vmem, size = 0x20000, scoped, tag = 'input window, operand 0, single buffered']
    #allocation4 [shape = 's32[1]{0}', space=sflag, size = 0x4, scoped, tag = 'scoped memory for tpu_custom_call.1']
    #allocation5 [shape = 's32[1]{0}', space=sflag, size = 0x4, scoped, tag = 'scoped memory for tpu_custom_call.1']
    #allocation6 [shape = 'u8[131072]{0}', space=vmem, size = 0x20000, scoped, tag = 'input window, operand 1, single buffered']
    #allocation7 [shape = 's32[1]{0}', space=sflag, size = 0x4, scoped, tag = 'scoped memory for tpu_custom_call.1']
    #allocation8 [shape = 'u8[1024]{0}', space=vmem, size = 0x400, scoped, tag = 'output window, operand 0, single buffered']
    %12 = vsyncpa [#allocation4], 0
    %13 = vsyncpa [#allocation7], 0
    %14 = vsyncpa [#allocation5], 0
    // Predicated region
    $region2: #{tpu_custom_call.1} parent=1 // pred_check
      _
    $region3: #{tpu_custom_call.1} parent=1 // pred_check_branch
      %16 = sbr.rel (0) target = $region5
    $region4: #{tpu_custom_call.1} parent=1 // pred_region
      %s18 = ssub.s32 4096, 4096
      %19 = vsyncadd [#allocation4], %s18
      %s20 = sshll.u32 [#allocation3], 4
      %s21 = int_to_ptr.vmem [resolvable:$true] %s20
      %26 = dma.hbm_to_vmem [thread:$0]  %s0, 4096, %s21, [#allocation4], 256, 256, 16
    $region5: #{tpu_custom_call.1} parent=1 // pred_fallthru
      _
    // Predicated region
    $region6: #{tpu_custom_call.1} parent=1 // pred_check
      _
    $region7: #{tpu_custom_call.1} parent=1 // pred_check_branch
      %28 = sbr.rel (0) target = $region9
    $region8: #{tpu_custom_call.1} parent=1 // pred_region
      %s30 = ssub.s32 4096, 4096
      %31 = vsyncadd [#allocation7], %s30
      %s32 = sshll.u32 [#allocation6], 4
      %s33 = int_to_ptr.vmem [resolvable:$true] %s32
      %38 = dma.hbm_to_vmem [thread:$0]  %s1, 4096, %s33, [#allocation7], 128, 128, 8
    $region9: #{tpu_custom_call.1} parent=1 // pred_fallthru
      _
    // Predicated region
    $region10: #{tpu_custom_call.1} parent=1 // pred_check
      _
    $region11: #{tpu_custom_call.1} parent=1 // pred_check_branch
      %40 = sbr.rel (0) target = $region13
    $region12: #{tpu_custom_call.1} parent=1 // pred_region
      _
    $region13: #{tpu_custom_call.1} parent=1 // pred_fallthru
      _
    // Predicated region
    $region14: #{tpu_custom_call.1} parent=1 // pred_check
      _
    $region15: #{tpu_custom_call.1} parent=1 // pred_check_branch
      %42 = sbr.rel (0) target = $region17
    $region16: #{tpu_custom_call.1} parent=1 // pred_region
      _
    $region17: #{tpu_custom_call.1} parent=1 // pred_fallthru
      _
    // Predicated region
    $region18: #{tpu_custom_call.1} parent=1 // pred_check
      _
    $region19: #{tpu_custom_call.1} parent=1 // pred_check_branch
      %44 = sbr.rel (0) target = $region21
    $region20: #{tpu_custom_call.1} parent=1 // pred_region
      _
    $region21: #{tpu_custom_call.1} parent=1 // pred_fallthru
      _
    // Predicated region
    $region22: #{tpu_custom_call.1} parent=1 // pred_check
      _
    $region23: #{tpu_custom_call.1} parent=1 // pred_check_branch
      %46 = sbr.rel (0) target = $region25
    $region24: #{tpu_custom_call.1} parent=1 // pred_region
      %47 = dma.done [#allocation4], 4096
    $region25: #{tpu_custom_call.1} parent=1 // pred_fallthru
      _
    // Predicated region
    $region26: #{tpu_custom_call.1} parent=1 // pred_check
      _
    $region27: #{tpu_custom_call.1} parent=1 // pred_check_branch
      %49 = sbr.rel (0) target = $region29
    $region28: #{tpu_custom_call.1} parent=1 // pred_region
      %50 = dma.done [#allocation7], 4096
    $region29: #{tpu_custom_call.1} parent=1 // pred_fallthru
      _
    %v51 = vld [vmem:[#allocation3] sm:$0xff]
    %v52 = vld [vmem:[#allocation3 + $0x8] sm:$0xff]
    %v53 = vld [vmem:[#allocation3 + $0x10] sm:$0xff]
    %v54 = vld [vmem:[#allocation3 + $0x18] sm:$0xff]
    %v55 = vld [vmem:[#allocation3 + $0x20] sm:$0xff]
    %v56 = vld [vmem:[#allocation3 + $0x28] sm:$0xff]
    %v57 = vld [vmem:[#allocation3 + $0x30] sm:$0xff]
    %v58 = vld [vmem:[#allocation3 + $0x38] sm:$0xff]
    %v59 = vld [vmem:[#allocation3 + $0x40] sm:$0xff]
    %v60 = vld [vmem:[#allocation3 + $0x48] sm:$0xff]
    %v61 = vld [vmem:[#allocation3 + $0x50] sm:$0xff]
    %v62 = vld [vmem:[#allocation3 + $0x58] sm:$0xff]
    %v63 = vld [vmem:[#allocation3 + $0x60] sm:$0xff]
    %v64 = vld [vmem:[#allocation3 + $0x68] sm:$0xff]
    %v65 = vld [vmem:[#allocation3 + $0x70] sm:$0xff]
    %v66 = vld [vmem:[#allocation3 + $0x78] sm:$0xff]
    %v67 = vld [vmem:[#allocation3 + $0x80] sm:$0xff]
    %v68 = vld [vmem:[#allocation3 + $0x88] sm:$0xff]
    %v69 = vld [vmem:[#allocation3 + $0x90] sm:$0xff]
    %v70 = vld [vmem:[#allocation3 + $0x98] sm:$0xff]
    %v71 = vld [vmem:[#allocation3 + $0xa0] sm:$0xff]
    %v72 = vld [vmem:[#allocation3 + $0xa8] sm:$0xff]
    %v73 = vld [vmem:[#allocation3 + $0xb0] sm:$0xff]
    %v74 = vld [vmem:[#allocation3 + $0xb8] sm:$0xff]
    %v75 = vld [vmem:[#allocation3 + $0xc0] sm:$0xff]
    %v76 = vld [vmem:[#allocation3 + $0xc8] sm:$0xff]
    %v77 = vld [vmem:[#allocation3 + $0xd0] sm:$0xff]
    %v78 = vld [vmem:[#allocation3 + $0xd8] sm:$0xff]
    %v79 = vld [vmem:[#allocation3 + $0xe0] sm:$0xff]
    %v80 = vld [vmem:[#allocation3 + $0xe8] sm:$0xff]
    %v81 = vld [vmem:[#allocation3 + $0xf0] sm:$0xff]
    %v82 = vld [vmem:[#allocation3 + $0xf8] sm:$0xff]
    %v83 = vld [vmem:[#allocation6] sm:$0xff]
    %v84 = vld [vmem:[#allocation6 + $0x8] sm:$0xff]
    %v85 = vld [vmem:[#allocation6 + $0x10] sm:$0xff]
    %v86 = vld [vmem:[#allocation6 + $0x18] sm:$0xff]
    %v87 = vld [vmem:[#allocation6 + $0x20] sm:$0xff]
    %v88 = vld [vmem:[#allocation6 + $0x28] sm:$0xff]
    %v89 = vld [vmem:[#allocation6 + $0x30] sm:$0xff]
    %v90 = vld [vmem:[#allocation6 + $0x38] sm:$0xff]
    %v91 = vld [vmem:[#allocation6 + $0x40] sm:$0xff]
    %v92 = vld [vmem:[#allocation6 + $0x48] sm:$0xff]
    %v93 = vld [vmem:[#allocation6 + $0x50] sm:$0xff]
    %v94 = vld [vmem:[#allocation6 + $0x58] sm:$0xff]
    %v95 = vld [vmem:[#allocation6 + $0x60] sm:$0xff]
    %v96 = vld [vmem:[#allocation6 + $0x68] sm:$0xff]
    %v97 = vld [vmem:[#allocation6 + $0x70] sm:$0xff]
    %v98 = vld [vmem:[#allocation6 + $0x78] sm:$0xff]
    %v99 = vld [vmem:[#allocation6 + $0x80] sm:$0xff]
    %v100 = vld [vmem:[#allocation6 + $0x88] sm:$0xff]
    %v101 = vld [vmem:[#allocation6 + $0x90] sm:$0xff]
    %v102 = vld [vmem:[#allocation6 + $0x98] sm:$0xff]
    %v103 = vld [vmem:[#allocation6 + $0xa0] sm:$0xff]
    %v104 = vld [vmem:[#allocation6 + $0xa8] sm:$0xff]
    %v105 = vld [vmem:[#allocation6 + $0xb0] sm:$0xff]
    %v106 = vld [vmem:[#allocation6 + $0xb8] sm:$0xff]
    %v107 = vld [vmem:[#allocation6 + $0xc0] sm:$0xff]
    %v108 = vld [vmem:[#allocation6 + $0xc8] sm:$0xff]
    %v109 = vld [vmem:[#allocation6 + $0xd0] sm:$0xff]
    %v110 = vld [vmem:[#allocation6 + $0xd8] sm:$0xff]
    %v111 = vld [vmem:[#allocation6 + $0xe0] sm:$0xff]
    %v112 = vld [vmem:[#allocation6 + $0xe8] sm:$0xff]
    %v113 = vld [vmem:[#allocation6 + $0xf0] sm:$0xff]
    %v114 = vld [vmem:[#allocation6 + $0xf8] sm:$0xff]
    %v115 = vld [vmem:[%s2] sm:$0x1]
    %v117 = vlaneseq
    %v118 = vshrl.u32 %v117, 7
    %v119 = vsub.s32 0, %v118
    %v120 = vrot.slane %v115, %v119
    %122 = vmatprep.subr.mxu0 0.0
    %123 = vmatpush1.msra.mxu0 %v83
    %124 = vmatprep.subr.mxu0 0.0
    %125 = vmatpush1.msra.mxu0 %v84
    %126 = vmatprep.subr.mxu0 0.0
    %127 = vmatpush1.msra.mxu0 %v85
    %128 = vmatprep.subr.mxu0 0.0
    %129 = vmatpush1.msra.mxu0 %v86
    %130 = vmatprep.subr.mxu0 0.0
    %131 = vmatpush1.msra.mxu0 %v87
    %132 = vmatprep.subr.mxu0 0.0
    %133 = vmatpush1.msra.mxu0 %v88
    %134 = vmatprep.subr.mxu0 0.0
    %135 = vmatpush1.msra.mxu0 %v89
    %136 = vmatprep.subr.mxu0 0.0
    %137 = vmatpush1.msra.mxu0 %v90
    %138 = vmatprep.subr.mxu0 0.0
    %139 = vmatpush1.msra.mxu0 %v91
    %140 = vmatprep.subr.mxu0 0.0
    %141 = vmatpush1.msra.mxu0 %v92
    %142 = vmatprep.subr.mxu0 0.0
    %143 = vmatpush1.msra.mxu0 %v93
    %144 = vmatprep.subr.mxu0 0.0
    %145 = vmatpush1.msra.mxu0 %v94
    %146 = vmatprep.subr.mxu0 0.0
    %147 = vmatpush1.msra.mxu0 %v95
    %148 = vmatprep.subr.mxu0 0.0
    %149 = vmatpush1.msra.mxu0 %v96
    %150 = vmatprep.subr.mxu0 0.0
    %151 = vmatpush1.msra.mxu0 %v97
    %152 = vmatprep.subr.mxu0 0.0
    %153 = vmatpush1.msra.mxu0 %v98
    %154 = vmatprep.subr.mxu0 0.0
    %155 = vmatpush1.msra.mxu0 %v99
    %156 = vmatprep.subr.mxu0 0.0
    %157 = vmatpush1.msra.mxu0 %v100
    %158 = vmatprep.subr.mxu0 0.0
    %159 = vmatpush1.msra.mxu0 %v101
    %160 = vmatprep.subr.mxu0 0.0
    %161 = vmatpush1.msra.mxu0 %v102
    %162 = vmatprep.subr.mxu0 0.0
    %163 = vmatpush1.msra.mxu0 %v103
    %164 = vmatprep.subr.mxu0 0.0
    %165 = vmatpush1.msra.mxu0 %v104
    %166 = vmatprep.subr.mxu0 0.0
    %167 = vmatpush1.msra.mxu0 %v105
    %168 = vmatprep.subr.mxu0 0.0
    %169 = vmatpush1.msra.mxu0 %v106
    %170 = vmatprep.subr.mxu0 0.0
    %171 = vmatpush1.msra.mxu0 %v107
    %172 = vmatprep.subr.mxu0 0.0
    %173 = vmatpush1.msra.mxu0 %v108
    %174 = vmatprep.subr.mxu0 0.0
    %175 = vmatpush1.msra.mxu0 %v109
    %176 = vmatprep.subr.mxu0 0.0
    %177 = vmatpush1.msra.mxu0 %v110
    %178 = vmatprep.subr.mxu0 0.0
    %179 = vmatpush1.msra.mxu0 %v111
    %180 = vmatprep.subr.mxu0 0.0
    %181 = vmatpush1.msra.mxu0 %v112
    %182 = vmatprep.subr.mxu0 0.0
    %183 = vmatpush1.msra.mxu0 %v113
    %184 = vmatprep.subr.mxu0 0.0
    %185 = vmatpush1.msra.mxu0 %v114
    %186 = vmatprep.mubr.f32.mxu0 %v52
    %187 = vmatmul.mubr.f32.gmra.mrb[0].mxu0 %v51
    %v188 = vpop.f32.mrb[0].mxu0
    %v189 = vadd.f32 %v120, %v188
    %v190 = vpop.f32.mrb[0].mxu0
    %191 = vmatprep.mubr.f32.mxu0 %v54
    %192 = vmatmul.mubr.f32.gmra.mrb[0].mxu0 %v53
    %v193 = vpop.f32.mrb[0].mxu0
    %v194 = vadd.f32 %v120, %v193
    %v195 = vpop.f32.mrb[0].mxu0
    %196 = vmatprep.mubr.f32.mxu0 %v56
    %197 = vmatmul.mubr.f32.gmra.mrb[0].mxu0 %v55
    %v198 = vpop.f32.mrb[0].mxu0
    %v199 = vadd.f32 %v120, %v198
    %v200 = vpop.f32.mrb[0].mxu0
    %201 = vmatprep.mubr.f32.mxu0 %v58
    %202 = vmatmul.mubr.f32.gmra.mrb[0].mxu0 %v57
    %v203 = vpop.f32.mrb[0].mxu0
    %v204 = vadd.f32 %v120, %v203
    %v205 = vpop.f32.mrb[0].mxu0
    %206 = vmatprep.mubr.f32.mxu0 %v60
    %207 = vmatmul.mubr.f32.gmra.mrb[0].mxu0 %v59
    %v208 = vpop.f32.mrb[0].mxu0
    %v209 = vadd.f32 %v120, %v208
    %v210 = vpop.f32.mrb[0].mxu0
    %211 = vmatprep.mubr.f32.mxu0 %v62
    %212 = vmatmul.mubr.f32.gmra.mrb[0].mxu0 %v61
    %v213 = vpop.f32.mrb[0].mxu0
    %v214 = vadd.f32 %v120, %v213
    %v215 = vpop.f32.mrb[0].mxu0
    %216 = vmatprep.mubr.f32.mxu0 %v64
    %217 = vmatmul.mubr.f32.gmra.mrb[0].mxu0 %v63
    %v218 = vpop.f32.mrb[0].mxu0
    %v219 = vadd.f32 %v120, %v218
    %v220 = vpop.f32.mrb[0].mxu0
    %221 = vmatprep.mubr.f32.mxu0 %v66
    %222 = vmatmul.mubr.f32.gmra.mrb[0].mxu0 %v65
    %v223 = vpop.f32.mrb[0].mxu0
    %v224 = vadd.f32 %v120, %v223
    %v225 = vpop.f32.mrb[0].mxu0
    %226 = vmatprep.mubr.f32.mxu0 %v68
    %227 = vmatmul.mubr.f32.gmra.mrb[0].mxu0 %v67
    %v228 = vpop.f32.mrb[0].mxu0
    %v229 = vadd.f32 %v120, %v228
    %v230 = vpop.f32.mrb[0].mxu0
    %231 = vmatprep.mubr.f32.mxu0 %v70
    %232 = vmatmul.mubr.f32.gmra.mrb[0].mxu0 %v69
    %v233 = vpop.f32.mrb[0].mxu0
    %v234 = vadd.f32 %v120, %v233
    %v235 = vpop.f32.mrb[0].mxu0
    %236 = vmatprep.mubr.f32.mxu0 %v72
    %237 = vmatmul.mubr.f32.gmra.mrb[0].mxu0 %v71
    %v238 = vpop.f32.mrb[0].mxu0
    %v239 = vadd.f32 %v120, %v238
    %v240 = vpop.f32.mrb[0].mxu0
    %241 = vmatprep.mubr.f32.mxu0 %v74
    %242 = vmatmul.mubr.f32.gmra.mrb[0].mxu0 %v73
    %v243 = vpop.f32.mrb[0].mxu0
    %v244 = vadd.f32 %v120, %v243
    %v245 = vpop.f32.mrb[0].mxu0
    %246 = vmatprep.mubr.f32.mxu0 %v76
    %247 = vmatmul.mubr.f32.gmra.mrb[0].mxu0 %v75
    %v248 = vpop.f32.mrb[0].mxu0
    %v249 = vadd.f32 %v120, %v248
    %v250 = vpop.f32.mrb[0].mxu0
    %251 = vmatprep.mubr.f32.mxu0 %v78
    %252 = vmatmul.mubr.f32.gmra.mrb[0].mxu0 %v77
    %v253 = vpop.f32.mrb[0].mxu0
    %v254 = vadd.f32 %v120, %v253
    %v255 = vpop.f32.mrb[0].mxu0
    %256 = vmatprep.mubr.f32.mxu0 %v80
    %257 = vmatmul.mubr.f32.gmra.mrb[0].mxu0 %v79
    %v258 = vpop.f32.mrb[0].mxu0
    %v259 = vadd.f32 %v120, %v258
    %v260 = vpop.f32.mrb[0].mxu0
    %261 = vmatprep.mubr.f32.mxu0 %v82
    %262 = vmatmul.mubr.f32.gmra.mrb[0].mxu0 %v81
    %v263 = vpop.f32.mrb[0].mxu0
    %v264 = vadd.f32 %v120, %v263
    %v265 = vpop.f32.mrb[0].mxu0
    %266 = vdwg.mxu0
    %v267 = vmul.f32 %v189, 0.5
    %v268 = vmul.f32 %v194, 0.5
    %v269 = vmul.f32 %v199, 0.5
    %v270 = vmul.f32 %v204, 0.5
    %v271 = vmul.f32 %v209, 0.5
    %v272 = vmul.f32 %v214, 0.5
    %v273 = vmul.f32 %v219, 0.5
    %v274 = vmul.f32 %v224, 0.5
    %v275 = vmul.f32 %v229, 0.5
    %v276 = vmul.f32 %v234, 0.5
    %v277 = vmul.f32 %v239, 0.5
    %v278 = vmul.f32 %v244, 0.5
    %v279 = vmul.f32 %v249, 0.5
    %v280 = vmul.f32 %v254, 0.5
    %v281 = vmul.f32 %v259, 0.5
    %v282 = vmul.f32 %v264, 0.5
    %v283 = vmul.f32 %v189, 0.70710677
    %v284 = vmul.f32 %v194, 0.70710677
    %v285 = vmul.f32 %v199, 0.70710677
    %v286 = vmul.f32 %v204, 0.70710677
    %v287 = vmul.f32 %v209, 0.70710677
    %v288 = vmul.f32 %v214, 0.70710677
    %v289 = vmul.f32 %v219, 0.70710677
    %v290 = vmul.f32 %v224, 0.70710677
    %v291 = vmul.f32 %v229, 0.70710677
    %v292 = vmul.f32 %v234, 0.70710677
    %v293 = vmul.f32 %v239, 0.70710677
    %v294 = vmul.f32 %v244, 0.70710677
    %v295 = vmul.f32 %v249, 0.70710677
    %v296 = vmul.f32 %v254, 0.70710677
    %v297 = vmul.f32 %v259, 0.70710677
    %v298 = vmul.f32 %v264, 0.70710677
    %v299 = verf.f32.pop %v283
    %v300 = verf.f32.pop %v284
    %v301 = verf.f32.pop %v285
    %v302 = verf.f32.pop %v286
    %v303 = verf.f32.pop %v287
    %v304 = verf.f32.pop %v288
    %v305 = verf.f32.pop %v289
    %v306 = verf.f32.pop %v290
    %v307 = verf.f32.pop %v291
    %v308 = verf.f32.pop %v292
    %v309 = verf.f32.pop %v293
    %v310 = verf.f32.pop %v294
    %v311 = verf.f32.pop %v295
    %v312 = verf.f32.pop %v296
    %v313 = verf.f32.pop %v297
    %v314 = verf.f32.pop %v298
    %v315 = vadd.f32 %v299, 1.0
    %v316 = vadd.f32 %v300, 1.0
    %v317 = vadd.f32 %v301, 1.0
    %v318 = vadd.f32 %v302, 1.0
    %v319 = vadd.f32 %v303, 1.0
    %v320 = vadd.f32 %v304, 1.0
    %v321 = vadd.f32 %v305, 1.0
    %v322 = vadd.f32 %v306, 1.0
    %v323 = vadd.f32 %v307, 1.0
    %v324 = vadd.f32 %v308, 1.0
    %v325 = vadd.f32 %v309, 1.0
    %v326 = vadd.f32 %v310, 1.0
    %v327 = vadd.f32 %v311, 1.0
    %v328 = vadd.f32 %v312, 1.0
    %v329 = vadd.f32 %v313, 1.0
    %v330 = vadd.f32 %v314, 1.0
    %v331 = vmul.f32 %v267, %v315
    %v332 = vmul.f32 %v268, %v316
    %v333 = vmul.f32 %v269, %v317
    %v334 = vmul.f32 %v270, %v318
    %v335 = vmul.f32 %v271, %v319
    %v336 = vmul.f32 %v272, %v320
    %v337 = vmul.f32 %v273, %v321
    %v338 = vmul.f32 %v274, %v322
    %v339 = vmul.f32 %v275, %v323
    %v340 = vmul.f32 %v276, %v324
    %v341 = vmul.f32 %v277, %v325
    %v342 = vmul.f32 %v278, %v326
    %v343 = vmul.f32 %v279, %v327
    %v344 = vmul.f32 %v280, %v328
    %v345 = vmul.f32 %v281, %v329
    %v346 = vmul.f32 %v282, %v330
    %v347 = vld [vmem:[%s3] sm:$0x1]
    %v348 = vld [vmem:[#allocation2] sm:$0x1]
    %350 = vset.pattern.permute.xlu0 0
    %351 = vperm.xlu0 %350, %v348
    %v352 = vpop.permute.xlu0 %351
    %v354 = vlaneseq
    %v355 = vshrl.u32 %v354, 7
    %v356 = vsub.s32 0, %v355
    %v357 = vrot.slane %v352, %v356
    %358 = vmatprep.subr.mxu0 0.0
    %359 = vmatpush1.xpose.msra.mxu0 %v331
    %360 = vmatprep.subr.mxu0 0.0
    %361 = vmatpush1.xpose.msra.mxu0 %v332
    %362 = vmatprep.subr.mxu0 0.0
    %363 = vmatpush1.xpose.msra.mxu0 %v333
    %364 = vmatprep.subr.mxu0 0.0
    %365 = vmatpush1.xpose.msra.mxu0 %v334
    %366 = vmatprep.subr.mxu0 0.0
    %367 = vmatpush1.xpose.msra.mxu0 %v335
    %368 = vmatprep.subr.mxu0 0.0
    %369 = vmatpush1.xpose.msra.mxu0 %v336
    %370 = vmatprep.subr.mxu0 0.0
    %371 = vmatpush1.xpose.msra.mxu0 %v337
    %372 = vmatprep.subr.mxu0 0.0
    %373 = vmatpush1.xpose.msra.mxu0 %v338
    %374 = vmatprep.subr.mxu0 0.0
    %375 = vmatpush1.xpose.msra.mxu0 %v339
    %376 = vmatprep.subr.mxu0 0.0
    %377 = vmatpush1.xpose.msra.mxu0 %v340
    %378 = vmatprep.subr.mxu0 0.0
    %379 = vmatpush1.xpose.msra.mxu0 %v341
    %380 = vmatprep.subr.mxu0 0.0
    %381 = vmatpush1.xpose.msra.mxu0 %v342
    %382 = vmatprep.subr.mxu0 0.0
    %383 = vmatpush1.xpose.msra.mxu0 %v343
    %384 = vmatprep.subr.mxu0 0.0
    %385 = vmatpush1.xpose.msra.mxu0 %v344
    %386 = vmatprep.subr.mxu0 0.0
    %387 = vmatpush1.xpose.msra.mxu0 %v345
    %388 = vmatprep.subr.mxu0 0.0
    %389 = vmatpush1.xpose.msra.mxu0 %v346
    %390 = vmatprep.subr.mxu0 0.0
    %391 = vmatpush1.xpose.msra.mxu0 0.0
    %392 = vmatprep.subr.mxu0 0.0
    %393 = vmatpush1.xpose.msra.mxu0 0.0
    %394 = vmatprep.subr.mxu0 0.0
    %395 = vmatpush1.xpose.msra.mxu0 0.0
    %396 = vmatprep.subr.mxu0 0.0
    %397 = vmatpush1.xpose.msra.mxu0 0.0
    %398 = vmatprep.subr.mxu0 0.0
    %399 = vmatpush1.xpose.msra.mxu0 0.0
    %400 = vmatprep.subr.mxu0 0.0
    %401 = vmatpush1.xpose.msra.mxu0 0.0
    %402 = vmatprep.subr.mxu0 0.0
    %403 = vmatpush1.xpose.msra.mxu0 0.0
    %404 = vmatprep.subr.mxu0 0.0
    %405 = vmatpush1.xpose.msra.mxu0 0.0
    %406 = vmatprep.subr.mxu0 0.0
    %407 = vmatpush1.xpose.msra.mxu0 0.0
    %408 = vmatprep.subr.mxu0 0.0
    %409 = vmatpush1.xpose.msra.mxu0 0.0
    %410 = vmatprep.subr.mxu0 0.0
    %411 = vmatpush1.xpose.msra.mxu0 0.0
    %412 = vmatprep.subr.mxu0 0.0
    %413 = vmatpush1.xpose.msra.mxu0 0.0
    %414 = vmatprep.subr.mxu0 0.0
    %415 = vmatpush1.xpose.msra.mxu0 0.0
    %416 = vmatprep.subr.mxu0 0.0
    %417 = vmatpush1.xpose.msra.mxu0 0.0
    %418 = vmatprep.subr.mxu0 0.0
    %419 = vmatpush1.xpose.msra.mxu0 0.0
    %420 = vmatprep.subr.mxu0 0.0
    %421 = vmatpush1.xpose.msra.mxu0 0.0
    %422 = vmatprep.mubr.f32.mxu0 0.0
    %423 = vmatmul.mubr.f32.gmra.mrb[0].mxu0 %v347
    %v424 = vpop.f32.mrb[0].mxu0
    %v425 = vadd.f32 %v357, %v424
    %v426 = vpop.f32.mrb[0].mxu0
    %427 = vdwg.mxu0
    %v428 = vand.u32 2147483647, %v425
    %v429 = vsub.f32 0.0, %v428
    %v430 = vmul.f32 %v429, 1.442695
    %v431 = vpow.pop %v430
    %v432 = vadd.f32 %v431, 1.0
    %v433 = vrcp.pop %v432
    %v434 = vmul.f32 1.0, %v433
    %v435 = vmul.f32 %v431, %v434
    %vm436 = vcmp.ge.f32.partialorder %v425, 0.0
    %v437 = vsel %vm436, %v434, %v435
    %438 = vst [vmem:[#allocation8] sm:$0x1] %v437
    %v439 = vsel %vm436, %v435, %v434
    %440 = vst [vmem:[#allocation8 + $0x1] sm:$0x1] %v439
    // Predicated region
    $region30: #{tpu_custom_call.1} parent=1 // pred_check
      _
    $region31: #{tpu_custom_call.1} parent=1 // pred_check_branch
      %442 = sbr.rel (0) target = $region33
    $region32: #{tpu_custom_call.1} parent=1 // pred_region
      %s444 = ssub.s32 32, 32
      %445 = vsyncadd [#allocation5], %s444
      %s447 = sshll.u32 [#allocation8], 4
      %s448 = int_to_ptr.vmem [resolvable:$true] %s447
      %450 = dma.vmem_to_hbm [thread:$0]  %s448, 32, %s5, [#allocation5]
    $region33: #{tpu_custom_call.1} parent=1 // pred_fallthru
      _
    // Predicated region
    $region34: #{tpu_custom_call.1} parent=1 // pred_check
      _
    $region35: #{tpu_custom_call.1} parent=1 // pred_check_branch
      %452 = sbr.rel (0) target = $region37
    $region36: #{tpu_custom_call.1} parent=1 // pred_region
      %453 = dma.done [#allocation5], 32
    $region37: #{tpu_custom_call.1} parent=1 // pred_fallthru
      _
    %454 = vsyncpa [#allocation4], 1
    %455 = vsyncpa [#allocation7], 1
    %456 = vsyncpa [#allocation5], 1

</llo_original>
